<compile_context>
chip_gen: v6e
topology: v6e:2x2x1
jax: 0.10.0
libtpu: 0.0.40
codegen_flags: <defaults>
</compile_context>

<pallas_src>
import jax
import jax.numpy as jnp
from jax.experimental import pallas as pl
from jax.experimental.pallas import tpu as pltpu

_NPAD = 128  # lane-padded classifier width (real classes live in [:, :n_cls])


# --------------------------------------------------------------------------- #
# Kernels
# --------------------------------------------------------------------------- #
def _sop_kernel(x_ref, w1_ref, b1_ref, w2_ref, b2_ref, o_ref):
    """Resident-W1 path: tanh(x @ W1 + b1) then lane-padded bf16 classifier."""
    x = x_ref[...].astype(w1_ref.dtype)                      # no-op if bf16 input
    h = jnp.tanh(
        jnp.dot(x, w1_ref[...], preferred_element_type=jnp.float32) + b1_ref[...]
    )
    o_ref[...] = (
        jnp.dot(h.astype(w2_ref.dtype), w2_ref[...],
                preferred_element_type=jnp.float32) + b2_ref[...]
    ).astype(o_ref.dtype)


def _sop_kernel_ktiled(x_ref, w1_ref, b1_ref, w2_ref, b2_ref, o_ref, acc_ref):
    """K-tiled path: stream W1 in (tk, H) blocks, accumulate x @ W1 in f32."""
    k = pl.program_id(1)

    @pl.when(k == 0)
    def _():
        acc_ref[...] = jnp.zeros_like(acc_ref)

    x = x_ref[...].astype(w1_ref.dtype)
    acc_ref[...] += jnp.dot(x, w1_ref[...], preferred_element_type=jnp.float32)

    @pl.when(k == pl.num_programs(1) - 1)
    def _():
        h = jnp.tanh(acc_ref[...] + b1_ref[...])
        o_ref[...] = (
            jnp.dot(h.astype(w2_ref.dtype), w2_ref[...],
                    preferred_element_type=jnp.float32) + b2_ref[...]
        ).astype(o_ref.dtype)


# --------------------------------------------------------------------------- #
# Helpers
# --------------------------------------------------------------------------- #
def _vmem_capacity_bytes():
    try:
        return int(pltpu.get_tpu_info().vmem_capacity_bytes)
    except Exception:
        return 64 << 20  # conservative per-TensorCore floor (v7x)


def _pick_tb(B, cap=512):
    """Batch tile: multiple of 8, prefers a divisor of B, >=2 steps if B>=16."""
    if B <= 8:
        return B
    if B >= 16:
        cap = min(cap, max(8, ((B // 2) // 8) * 8))   # both v7x TCs get work
    else:
        cap = min(cap, B)
    best = 0
    t = 8
    while t <= min(B, cap):
        if B % t == 0:
            best = t
        t += 8
    return best if best else min(cap, 256)            # padding path


def _pick_tk(H):
    for tk in (2048, 1024, 512, 256, 128):
        if H % tk == 0:
            return tk
    return None


# --------------------------------------------------------------------------- #
# Wrapper
# --------------------------------------------------------------------------- #
def sentence_order_prediction(sequence_output, w1, b1, w2, b2,
                              weight_dtype=jnp.bfloat16,
                              force_ktiled=None, tk=None):
    """sequence_output: [B, S, H] (f32 or bf16).
    w1: [H, H] pooler weight (pre-transposed: y = x @ w1 + b1), b1: [H]
    w2: [H, 2] classifier weight (pre-transposed),              b2: [2]
    returns: [B, 2] float32
    """
    B, S, H = sequence_output.shape
    n_cls = w2.shape[-1]
    x_itemsize = jnp.dtype(sequence_output.dtype).itemsize
    w_itemsize = jnp.dtype(weight_dtype).itemsize

    # --- parameter prep (cheap; folded under jit) ----------------------------
    w1c = w1.astype(weight_dtype)                                   # bf16 W1
    b1r = jnp.reshape(b1, (1, H)).astype(jnp.float32)
    # Classifier lane-padded to 128 cols and kept in bf16 (zero padding exact).
    w2p = jnp.zeros((H, _NPAD), weight_dtype).at[:, :n_cls].set(
        w2.astype(weight_dtype))
    b2p = jnp.zeros((1, _NPAD), jnp.float32).at[:, :n_cls].set(
        jnp.reshape(b2, (1, n_cls)).astype(jnp.float32))

    vmem_cap = _vmem_capacity_bytes()
    vmem_ceiling = (vmem_cap * 7) // 8       # headroom for Mosaic internal scratch
    slack = 4 << 20

    tb = _pick_tb(B)

    # sanitize optional tk override
    if tk is not None and (tk % 128 != 0 or H % tk != 0):
        tk = None
    tk_ = tk if tk is not None else _pick_tk(H)
    can_ktile = tk_ is not None

    small_resident = H * _NPAD * w_itemsize + H * 4 + _NPAD * 4      # w2p, b1, b2

    def _resident_budget(tb_):
        return (H * H * w_itemsize                                   # W1, 1-buffered
                + small_resident
                + 2 * (tb_ * H * x_itemsize + tb_ * _NPAD * 4)       # x/out 2-buffered
                + tb_ * H * 4 + 2 * tb_ * H * w_itemsize             # f32 h + bf16 casts
                + slack)

    def _ktiled_budget(tb_):
        return (2 * tk_ * H * w_itemsize                             # streamed W1
                + small_resident
                + 2 * (tb_ * tk_ * x_itemsize + tb_ * _NPAD * 4)
                + tb_ * H * 4                                        # acc scratch
                + tb_ * tk_ * w_itemsize + tb_ * H * w_itemsize      # bf16 casts
                + slack)

    if force_ktiled is None:
        use_ktiled = can_ktile and _resident_budget(tb) > (2 * vmem_cap) // 3
    else:
        use_ktiled = bool(force_ktiled) and can_ktile

    budget_fn = _ktiled_budget if use_ktiled else _resident_budget
    while budget_fn(tb) > vmem_ceiling and tb > 8:
        tb = max(8, ((tb // 2) // 8) * 8)

    grid_b = pl.cdiv(B, tb)
    B_pad = grid_b * tb

    # --- fused [CLS] gather ---------------------------------------------------
    # Contiguous [B, S, H] -> [B, S*H] is metadata-only; the x BlockSpec window
    # covers only the first H lanes (== token 0) of each row, so only the CLS
    # tokens are DMA'd.  Fall back to a wrapper gather when lane-unaligned or
    # when batch padding is required.
    fuse_gather = (H % 128 == 0) and (B_pad == B)
    if fuse_gather:
        x_in = sequence_output.reshape(B, S * H)
    else:
        x_in = sequence_output[:, 0, :]
        if B_pad != B:   # pad so the last grid step never computes on garbage
            x_in = jnp.pad(x_in, ((0, B_pad - B), (0, 0)))

    vmem_bytes = int(min(max(budget_fn(tb), 32 << 20), vmem_ceiling))
    cost = pl.CostEstimate(
        flops=2 * B_pad * H * H + 2 * B_pad * H * _NPAD,
        transcendentals=B_pad * H,
        bytes_accessed=(H * H * w_itemsize + H * _NPAD * w_itemsize
                        + B_pad * H * x_itemsize + B_pad * _NPAD * 4),
    )

    def _call(single_buffer_weights):
        def wspec(shape, idx):
            if single_buffer_weights:
                return pl.BlockSpec(shape, idx, pipeline_mode=pl.Buffered(1))
            return pl.BlockSpec(shape, idx)

        if use_ktiled:
            grid = (grid_b, H // tk_)
            in_specs = [
                pl.BlockSpec((tb, tk_), lambda i, k: (i, k)),   # x K-slice (CLS cols)
                pl.BlockSpec((tk_, H), lambda i, k: (k, 0)),    # W1 streamed blocks
                wspec((1, H), lambda i, k: (0, 0)),             # b1 (resident)
                wspec((H, _NPAD), lambda i, k: (0, 0)),         # W2 padded (resident)
                wspec((1, _NPAD), lambda i, k: (0, 0)),         # b2 padded (resident)
            ]
            out_specs = pl.BlockSpec((tb, _NPAD), lambda i, k: (i, 0))
            scratch = [pltpu.VMEM((tb, H), jnp.float32)]
            semantics = ("parallel", "arbitrary")
            kernel = _sop_kernel_ktiled
        else:
            grid = (grid_b,)
            in_specs = [
                pl.BlockSpec((tb, H), lambda i: (i, 0)),        # [CLS] tile
                wspec((H, H), lambda i: (0, 0)),                # W1 (bf16, resident)
                wspec((1, H), lambda i: (0, 0)),                # b1
                wspec((H, _NPAD), lambda i: (0, 0)),            # W2 padded (bf16)
                wspec((1, _NPAD), lambda i: (0, 0)),            # b2 padded
            ]
            out_specs = pl.BlockSpec((tb, _NPAD), lambda i: (i, 0))
            scratch = []
            semantics = ("parallel",)
            kernel = _sop_kernel

        # If the fallback (default double-buffered weights) is used, allow the
        # extra weight copy in the declared limit — still clamped to the ceiling.
        extra = 0 if single_buffer_weights else (
            small_resident + (0 if use_ktiled else H * H * w_itemsize))

        return pl.pallas_call(
            kernel,
            out_shape=jax.ShapeDtypeStruct((B_pad, _NPAD), jnp.float32),
            grid=grid,
            in_specs=in_specs,
            out_specs=out_specs,
            scratch_shapes=scratch,
            compiler_params=pltpu.CompilerParams(
                dimension_semantics=semantics,
                vmem_limit_bytes=int(min(vmem_bytes + extra, vmem_ceiling)),
            ),
            cost_estimate=cost,
        )(x_in, w1c, b1r, w2p, b2p)

    try:
        out_padded = _call(True)
    except Exception:
        # This Mosaic build rejected pl.Buffered(1); fall back to default
        # double-buffering (identical numerics, more weight VMEM).
        out_padded = _call(False)

    return out_padded[:B, :n_cls]


def _reference(sequence_output, w1, b1, w2, b2):
    first_tok = sequence_output[:, 0, :]
    h = jnp.tanh(first_tok @ w1 + b1)
    return h @ w2 + b2


if __name__ == "__main__":
    key = jax.random.PRNGKey(0)

    # ---- test 1: resident-W1 path (small, lane/sublane-aligned shapes) ------
    B, S, H = 8, 8, 128
    k_x, k_w1, k_b1, k_w2, k_b2 = jax.random.split(key, 5)
    sequence_output = jax.random.normal(k_x, (B, S, H), dtype=jnp.float32)
    # PyTorch Linear params stored pre-transposed so the kernel does x @ W + b.
    w1 = jax.random.normal(k_w1, (H, H), dtype=jnp.float32) * 0.02
    b1 = jax.random.normal(k_b1, (H,), dtype=jnp.float32) * 0.02
    w2 = jax.random.normal(k_w2, (H, 2), dtype=jnp.float32) * 0.02
    b2 = jax.random.normal(k_b2, (2,), dtype=jnp.float32) * 0.02

    out = jax.block_until_ready(
        sentence_order_prediction(sequence_output, w1, b1, w2, b2))
    ref = _reference(sequence_output, w1, b1, w2, b2)
    assert out.shape == (B, 2), out.shape
    # bf16 weights / bf16 classifier -> loosened tolerance vs. the f32 reference.
    assert jnp.allclose(out, ref, atol=1e-2, rtol=1e-2), (out, ref)

    # ---- test 2: K-tiled streamed-W1 path (forced, 2 K-steps) ---------------
    H2 = 256
    k_x2, k_w12, k_b12, k_w22, k_b22 = jax.random.split(jax.random.PRNGKey(1), 5)
    seq2 = jax.random.normal(k_x2, (B, S, H2), dtype=jnp.float32)
    w12 = jax.random.normal(k_w12, (H2, H2), dtype=jnp.float32) * 0.02
    b12 = jax.random.normal(k_b12, (H2,), dtype=jnp.float32) * 0.02
    w22 = jax.random.normal(k_w22, (H2, 2), dtype=jnp.float32) * 0.02
    b22 = jax.random.normal(k_b22, (2,), dtype=jnp.float32) * 0.02

    out2 = jax.block_until_ready(
        sentence_order_prediction(seq2, w12, b12, w22, b22,
                                  force_ktiled=True, tk=128))
    ref2 = _reference(seq2, w12, b12, w22, b22)
    assert out2.shape == (B, 2), out2.shape
    assert jnp.allclose(out2, ref2, atol=1e-2, rtol=1e-2), (out2, ref2)

    print("KERNEL_OK")
</pallas_src>

<mosaic_0001>
module attributes {stable_mosaic.version = 11 : i64} {
  func.func @_sop_kernel(%arg0: i32, %arg1: memref<8x128xf32, #tpu.memory_space<vmem>>, %arg2: memref<128x128xbf16, #tpu.memory_space<vmem>>, %arg3: memref<1x128xf32, #tpu.memory_space<vmem>>, %arg4: memref<128x128xbf16, #tpu.memory_space<vmem>>, %arg5: memref<1x128xf32, #tpu.memory_space<vmem>>, %arg6: memref<8x128xf32, #tpu.memory_space<vmem>>) attributes {dimension_semantics = [#tpu.dimension_semantics<parallel>], iteration_bounds = array<i64: 1>, scalar_prefetch = 0 : i64, scratch_operands = 0 : i64, tpu.core_type = #tpu.core_type<tc>, window_params = [{transform_indices = @transform_0, window_bounds = array<i64: 8, 128>}, {pipeline_mode = #tpu.pipeline_mode<synchronous>, transform_indices = @transform_1, window_bounds = array<i64: 128, 128>}, {pipeline_mode = #tpu.pipeline_mode<synchronous>, transform_indices = @transform_2, window_bounds = array<i64: 1, 128>}, {pipeline_mode = #tpu.pipeline_mode<synchronous>, transform_indices = @transform_3, window_bounds = array<i64: 128, 128>}, {pipeline_mode = #tpu.pipeline_mode<synchronous>, transform_indices = @transform_4, window_bounds = array<i64: 1, 128>}, {transform_indices = @transform_5, window_bounds = array<i64: 8, 128>}]} {
    %c0 = arith.constant 0 : index
    %c0_0 = arith.constant 0 : index
    %0 = vector.load %arg1[%c0, %c0_0] : memref<8x128xf32, #tpu.memory_space<vmem>>, vector<8x128xf32>
    %1 = arith.truncf %0 : vector<8x128xf32> to vector<8x128xbf16>
    %c0_1 = arith.constant 0 : index
    %c0_2 = arith.constant 0 : index
    %2 = vector.load %arg2[%c0_1, %c0_2] : memref<128x128xbf16, #tpu.memory_space<vmem>>, vector<128x128xbf16>
    %cst = arith.constant dense<0.000000e+00> : vector<8x128xf32>
    %3 = tpu.matmul %1, %2, %cst {dimension_numbers = #tpu.dot_dimension_numbers<[1], [0], [0], [1], [0, 0, 1, 1], [], []>} : vector<8x128xbf16>, vector<128x128xbf16>, vector<8x128xf32> -> vector<8x128xf32>
    %c0_3 = arith.constant 0 : index
    %c0_4 = arith.constant 0 : index
    %4 = vector.load %arg3[%c0_3, %c0_4] : memref<1x128xf32, #tpu.memory_space<vmem>>, vector<1x128xf32>
    %5 = vector.broadcast %4 : vector<1x128xf32> to vector<8x128xf32>
    %6 = arith.addf %3, %5 : vector<8x128xf32>
    %7 = math.tanh %6 : vector<8x128xf32>
    %8 = arith.truncf %7 : vector<8x128xf32> to vector<8x128xbf16>
    %c0_5 = arith.constant 0 : index
    %c0_6 = arith.constant 0 : index
    %9 = vector.load %arg4[%c0_5, %c0_6] : memref<128x128xbf16, #tpu.memory_space<vmem>>, vector<128x128xbf16>
    %cst_7 = arith.constant dense<0.000000e+00> : vector<8x128xf32>
    %10 = tpu.matmul %8, %9, %cst_7 {dimension_numbers = #tpu.dot_dimension_numbers<[1], [0], [0], [1], [0, 0, 1, 1], [], []>} : vector<8x128xbf16>, vector<128x128xbf16>, vector<8x128xf32> -> vector<8x128xf32>
    %c0_8 = arith.constant 0 : index
    %c0_9 = arith.constant 0 : index
    %11 = vector.load %arg5[%c0_8, %c0_9] : memref<1x128xf32, #tpu.memory_space<vmem>>, vector<1x128xf32>
    %12 = vector.broadcast %11 : vector<1x128xf32> to vector<8x128xf32>
    %13 = arith.addf %10, %12 : vector<8x128xf32>
    %c0_10 = arith.constant 0 : index
    %c0_11 = arith.constant 0 : index
    %14 = vector.load %arg6[%c0_10, %c0_11] : memref<8x128xf32, #tpu.memory_space<vmem>>, vector<8x128xf32>
    tpu.vector_store %arg6[%c0_10, %c0_11], %13 {strides = array<i32>} : memref<8x128xf32, #tpu.memory_space<vmem>>, vector<8x128xf32>,
    return
  }
  func.func @transform_0(%arg0: i32) -> (i32, i32) {
    %c0_i32 = arith.constant 0 : i32
    %c0_i32_0 = arith.constant 0 : i32
    return %arg0, %c0_i32 : i32, i32
  }
  func.func @transform_1(%arg0: i32) -> (i32, i32) {
    %c0_i32 = arith.constant 0 : i32
    %c0_i32_0 = arith.constant 0 : i32
    %c0_i32_1 = arith.constant 0 : i32
    return %c0_i32, %c0_i32_0 : i32, i32
  }
  func.func @transform_2(%arg0: i32) -> (i32, i32) {
    %c0_i32 = arith.constant 0 : i32
    %c0_i32_0 = arith.constant 0 : i32
    %c0_i32_1 = arith.constant 0 : i32
    return %c0_i32, %c0_i32_0 : i32, i32
  }
  func.func @transform_3(%arg0: i32) -> (i32, i32) {
    %c0_i32 = arith.constant 0 : i32
    %c0_i32_0 = arith.constant 0 : i32
    %c0_i32_1 = arith.constant 0 : i32
    return %c0_i32, %c0_i32_0 : i32, i32
  }
  func.func @transform_4(%arg0: i32) -> (i32, i32) {
    %c0_i32 = arith.constant 0 : i32
    %c0_i32_0 = arith.constant 0 : i32
    %c0_i32_1 = arith.constant 0 : i32
    return %c0_i32, %c0_i32_0 : i32, i32
  }
  func.func @transform_5(%arg0: i32) -> (i32, i32) {
    %c0_i32 = arith.constant 0 : i32
    %c0_i32_0 = arith.constant 0 : i32
    return %arg0, %c0_i32 : i32, i32
  }
}

module attributes {stable_mosaic.version = 11 : i64} {
  func.func @_sop_kernel(%arg0: i32, %arg1: memref<8x128xf32, #tpu.memory_space<vmem>>, %arg2: memref<128x128xbf16, #tpu.memory_space<vmem>>, %arg3: memref<1x128xf32, #tpu.memory_space<vmem>>, %arg4: memref<128x128xbf16, #tpu.memory_space<vmem>>, %arg5: memref<1x128xf32, #tpu.memory_space<vmem>>, %arg6: memref<8x128xf32, #tpu.memory_space<vmem>>) attributes {dimension_semantics = [#tpu.dimension_semantics<parallel>], iteration_bounds = array<i64: 1>, scalar_prefetch = 0 : i64, scratch_operands = 0 : i64, tpu.core_type = #tpu.core_type<tc>, window_params = [{transform_indices = @transform_0, window_bounds = array<i64: 8, 128>}, {pipeline_mode = #tpu.pipeline_mode<synchronous>, transform_indices = @transform_1, window_bounds = array<i64: 128, 128>}, {pipeline_mode = #tpu.pipeline_mode<synchronous>, transform_indices = @transform_2, window_bounds = array<i64: 1, 128>}, {pipeline_mode = #tpu.pipeline_mode<synchronous>, transform_indices = @transform_3, window_bounds = array<i64: 128, 128>}, {pipeline_mode = #tpu.pipeline_mode<synchronous>, transform_indices = @transform_4, window_bounds = array<i64: 1, 128>}, {transform_indices = @transform_5, window_bounds = array<i64: 8, 128>}]} {
    %c0 = arith.constant 0 : index
    %c0_0 = arith.constant 0 : index
    %0 = vector.load %arg1[%c0, %c0_0] : memref<8x128xf32, #tpu.memory_space<vmem>>, vector<8x128xf32>
    %1 = arith.truncf %0 : vector<8x128xf32> to vector<8x128xbf16>
    %c0_1 = arith.constant 0 : index
    %c0_2 = arith.constant 0 : index
    %2 = vector.load %arg2[%c0_1, %c0_2] : memref<128x128xbf16, #tpu.memory_space<vmem>>, vector<128x128xbf16>
    %cst = arith.constant dense<0.000000e+00> : vector<8x128xf32>
    %3 = tpu.matmul %1, %2, %cst {dimension_numbers = #tpu.dot_dimension_numbers<[1], [0], [0], [1], [0, 0, 1, 1], [], []>} : vector<8x128xbf16>, vector<128x128xbf16>, vector<8x128xf32> -> vector<8x128xf32>
    %c0_3 = arith.constant 0 : index
    %c0_4 = arith.constant 0 : index
    %4 = vector.load %arg3[%c0_3, %c0_4] : memref<1x128xf32, #tpu.memory_space<vmem>>, vector<1x128xf32>
    %5 = vector.broadcast %4 : vector<1x128xf32> to vector<8x128xf32>
    %6 = arith.addf %3, %5 : vector<8x128xf32>
    %7 = math.tanh %6 : vector<8x128xf32>
    %8 = arith.truncf %7 : vector<8x128xf32> to vector<8x128xbf16>
    %c0_5 = arith.constant 0 : index
    %c0_6 = arith.constant 0 : index
    %9 = vector.load %arg4[%c0_5, %c0_6] : memref<128x128xbf16, #tpu.memory_space<vmem>>, vector<128x128xbf16>
    %cst_7 = arith.constant dense<0.000000e+00> : vector<8x128xf32>
    %10 = tpu.matmul %8, %9, %cst_7 {dimension_numbers = #tpu.dot_dimension_numbers<[1], [0], [0], [1], [0, 0, 1, 1], [], []>} : vector<8x128xbf16>, vector<128x128xbf16>, vector<8x128xf32> -> vector<8x128xf32>
    %c0_8 = arith.constant 0 : index
    %c0_9 = arith.constant 0 : index
    %11 = vector.load %arg5[%c0_8, %c0_9] : memref<1x128xf32, #tpu.memory_space<vmem>>, vector<1x128xf32>
    %12 = vector.broadcast %11 : vector<1x128xf32> to vector<8x128xf32>
    %13 = arith.addf %10, %12 : vector<8x128xf32>
    %c0_10 = arith.constant 0 : index
    %c0_11 = arith.constant 0 : index
    %14 = vector.load %arg6[%c0_10, %c0_11] : memref<8x128xf32, #tpu.memory_space<vmem>>, vector<8x128xf32>
    tpu.vector_store %arg6[%c0_10, %c0_11], %13 {strides = array<i32>} : memref<8x128xf32, #tpu.memory_space<vmem>>, vector<8x128xf32>,
    return
  }
  func.func @transform_0(%arg0: i32) -> (i32, i32) {
    %c0_i32 = arith.constant 0 : i32
    %c0_i32_0 = arith.constant 0 : i32
    return %arg0, %c0_i32 : i32, i32
  }
  func.func @transform_1(%arg0: i32) -> (i32, i32) {
    %c0_i32 = arith.constant 0 : i32
    %c0_i32_0 = arith.constant 0 : i32
    %c0_i32_1 = arith.constant 0 : i32
    return %c0_i32, %c0_i32_0 : i32, i32
  }
  func.func @transform_2(%arg0: i32) -> (i32, i32) {
    %c0_i32 = arith.constant 0 : i32
    %c0_i32_0 = arith.constant 0 : i32
    %c0_i32_1 = arith.constant 0 : i32
    return %c0_i32, %c0_i32_0 : i32, i32
  }
  func.func @transform_3(%arg0: i32) -> (i32, i32) {
    %c0_i32 = arith.constant 0 : i32
    %c0_i32_0 = arith.constant 0 : i32
    %c0_i32_1 = arith.constant 0 : i32
    return %c0_i32, %c0_i32_0 : i32, i32
  }
  func.func @transform_4(%arg0: i32) -> (i32, i32) {
    %c0_i32 = arith.constant 0 : i32
    %c0_i32_0 = arith.constant 0 : i32
    %c0_i32_1 = arith.constant 0 : i32
    return %c0_i32, %c0_i32_0 : i32, i32
  }
  func.func @transform_5(%arg0: i32) -> (i32, i32) {
    %c0_i32 = arith.constant 0 : i32
    %c0_i32_0 = arith.constant 0 : i32
    return %arg0, %c0_i32 : i32, i32
  }
}

</mosaic_0001>

<llo_original>
// kernel: tpu_custom_call.1
$region0: #{tpu_custom_call.1}
  #allocation0 [shape = 'u32[]', space=smem, size = 0x4, offset = 0x4, fixed_abs, tag = 'smem constant byte address 0x4 - core index']
  #allocation1 [shape = 'u32[144,128]{1,0:T(1,128)}', space=vmem, size = 0x12000, scoped, tag = 'internal scratch']
  %s0 = inlined_call_operand.hbm [shape: f32[8,1024], index: 0, kind: input, shape index: {}]
  %s1 = inlined_call_operand.hbm [shape: bf16[128,128], index: 1, kind: input, shape index: {}]
  %s2 = inlined_call_operand.vmem [shape: f32[1,128], index: 2, kind: input, shape index: {}]
  %s3 = inlined_call_operand.hbm [shape: bf16[128,128], index: 3, kind: input, shape index: {}]
  %s4 = inlined_call_operand.vmem [shape: f32[1,128], index: 4, kind: input, shape index: {}]
  %s5 = inlined_call_operand.hbm [shape: f32[8,128], index: 5, kind: output, shape index: {}]
  %s6 = sld [smem:[#allocation0]]
  $region42: #{tpu_custom_call.1} parent=0
    _
  %s8 = ssub.s32 1, %s6
  %s9 = scalar_select 0, %s8, %s6
  $region1: #{tpu_custom_call.1} parent=0
    #allocation2 [shape = 'u8[4096]{0}', space=vmem, size = 0x1000, scoped, tag = 'input window, operand 0, single buffered']
    #allocation3 [shape = 's32[1]{0}', space=sflag, size = 0x4, scoped, tag = 'scoped memory for tpu_custom_call.1']
    #allocation4 [shape = 's32[1]{0}', space=sflag, size = 0x4, scoped, tag = 'scoped memory for tpu_custom_call.1']
    #allocation5 [shape = 'u8[32768]{0}', space=vmem, size = 0x8000, scoped, tag = 'input window, operand 1, single buffered']
    #allocation6 [shape = 's32[1]{0}', space=sflag, size = 0x4, scoped, tag = 'scoped memory for tpu_custom_call.1']
    #allocation7 [shape = 'u8[32768]{0}', space=vmem, size = 0x8000, scoped, tag = 'input window, operand 3, single buffered']
    #allocation8 [shape = 'u8[4096]{0}', space=vmem, size = 0x1000, scoped, tag = 'output window, operand 0, single buffered']
    %10 = vsyncpa [#allocation3], 0
    %11 = vsyncpa [#allocation6], 0
    %12 = vsyncpa [#allocation4], 0
    // Predicated region
    $region2: #{tpu_custom_call.1} parent=1 // pred_check
      _
    $region3: #{tpu_custom_call.1} parent=1 // pred_check_branch
      %14 = sbr.rel (0) target = $region5
    $region4: #{tpu_custom_call.1} parent=1 // pred_region
      %s16 = ssub.s32 128, 128
      %17 = vsyncadd [#allocation3], %s16
      %s19 = sshll.u32 [#allocation2], 4
      %s20 = int_to_ptr.vmem [resolvable:$true] %s19
      %22 = dma.hbm_to_vmem [thread:$0]  %s0, 128, %s20, [#allocation3]
    $region5: #{tpu_custom_call.1} parent=1 // pred_fallthru
      _
    // Predicated region
    $region6: #{tpu_custom_call.1} parent=1 // pred_check
      _
    $region7: #{tpu_custom_call.1} parent=1 // pred_check_branch
      %24 = sbr.rel (0) target = $region9
    $region8: #{tpu_custom_call.1} parent=1 // pred_region
      %s26 = ssub.s32 1024, 1024
      %27 = vsyncadd [#allocation6], %s26
      %s28 = sshll.u32 [#allocation5], 4
      %s29 = int_to_ptr.vmem [resolvable:$true] %s28
      %34 = dma.hbm_to_vmem [thread:$0]  %s1, 1024, %s29, [#allocation6], 64, 64, 4
    $region9: #{tpu_custom_call.1} parent=1 // pred_fallthru
      _
    // Predicated region
    $region10: #{tpu_custom_call.1} parent=1 // pred_check
      _
    $region11: #{tpu_custom_call.1} parent=1 // pred_check_branch
      %36 = sbr.rel (0) target = $region13
    $region12: #{tpu_custom_call.1} parent=1 // pred_region
      _
    $region13: #{tpu_custom_call.1} parent=1 // pred_fallthru
      _
    // Predicated region
    $region14: #{tpu_custom_call.1} parent=1 // pred_check
      _
    $region15: #{tpu_custom_call.1} parent=1 // pred_check_branch
      %38 = sbr.rel (0) target = $region17
    $region16: #{tpu_custom_call.1} parent=1 // pred_region
      %s40 = ssub.s32 1024, 1024
      %41 = vsyncadd [#allocation6], %s40
      %s42 = sshll.u32 [#allocation7], 4
      %s43 = int_to_ptr.vmem [resolvable:$true] %s42
      %48 = dma.hbm_to_vmem [thread:$0]  %s3, 1024, %s43, [#allocation6], 64, 64, 4
    $region17: #{tpu_custom_call.1} parent=1 // pred_fallthru
      _
    // Predicated region
    $region18: #{tpu_custom_call.1} parent=1 // pred_check
      _
    $region19: #{tpu_custom_call.1} parent=1 // pred_check_branch
      %50 = sbr.rel (0) target = $region21
    $region20: #{tpu_custom_call.1} parent=1 // pred_region
      _
    $region21: #{tpu_custom_call.1} parent=1 // pred_fallthru
      _
    // Predicated region
    $region22: #{tpu_custom_call.1} parent=1 // pred_check
      _
    $region23: #{tpu_custom_call.1} parent=1 // pred_check_branch
      %52 = sbr.rel (0) target = $region25
    $region24: #{tpu_custom_call.1} parent=1 // pred_region
      %53 = dma.done [#allocation3], 128
    $region25: #{tpu_custom_call.1} parent=1 // pred_fallthru
      _
    // Predicated region
    $region26: #{tpu_custom_call.1} parent=1 // pred_check
      _
    $region27: #{tpu_custom_call.1} parent=1 // pred_check_branch
      %55 = sbr.rel (0) target = $region29
    $region28: #{tpu_custom_call.1} parent=1 // pred_region
      %56 = dma.done [#allocation6], 1024
    $region29: #{tpu_custom_call.1} parent=1 // pred_fallthru
      _
    // Predicated region
    $region30: #{tpu_custom_call.1} parent=1 // pred_check
      _
    $region31: #{tpu_custom_call.1} parent=1 // pred_check_branch
      %58 = sbr.rel (0) target = $region33
    $region32: #{tpu_custom_call.1} parent=1 // pred_region
      %59 = dma.done [#allocation6], 1024
    $region33: #{tpu_custom_call.1} parent=1 // pred_fallthru
      _
    %v61 = vld [vmem:[#allocation2] sm:$0xff]
    %v62 = vpack.c.bf16 %v61, %v61
    %v63 = vld [vmem:[#allocation5] sm:$0xf]
    %v64 = vld [vmem:[#allocation5 + $0x4] sm:$0xf]
    %v65 = vld [vmem:[#allocation5 + $0x8] sm:$0xf]
    %v66 = vld [vmem:[#allocation5 + $0xc] sm:$0xf]
    %v67 = vld [vmem:[#allocation5 + $0x10] sm:$0xf]
    %v68 = vld [vmem:[#allocation5 + $0x14] sm:$0xf]
    %v69 = vld [vmem:[#allocation5 + $0x18] sm:$0xf]
    %v70 = vld [vmem:[#allocation5 + $0x1c] sm:$0xf]
    %v71 = vld [vmem:[#allocation5 + $0x20] sm:$0xf]
    %v72 = vld [vmem:[#allocation5 + $0x24] sm:$0xf]
    %v73 = vld [vmem:[#allocation5 + $0x28] sm:$0xf]
    %v74 = vld [vmem:[#allocation5 + $0x2c] sm:$0xf]
    %v75 = vld [vmem:[#allocation5 + $0x30] sm:$0xf]
    %v76 = vld [vmem:[#allocation5 + $0x34] sm:$0xf]
    %v77 = vld [vmem:[#allocation5 + $0x38] sm:$0xf]
    %v78 = vld [vmem:[#allocation5 + $0x3c] sm:$0xf]
    %v79 = vld [vmem:[%s2] sm:$0x1]
    %v81 = vlaneseq
    %v82 = vshrl.u32 %v81, 7
    %v83 = vsub.s32 0, %v82
    %v84 = vrot.slane %v79, %v83
    %v102 = vunpack.c.l.b16 %v63
    %v103 = vunpack.c.l.b16 %v64
    %v104 = vunpack.c.l.b16 %v65
    %v105 = vunpack.c.l.b16 %v66
    %v106 = vunpack.c.l.b16 %v67
    %v107 = vunpack.c.l.b16 %v68
    %v108 = vunpack.c.l.b16 %v69
    %v109 = vunpack.c.l.b16 %v70
    %v110 = vunpack.c.l.b16 %v71
    %v111 = vunpack.c.l.b16 %v72
    %v112 = vunpack.c.l.b16 %v73
    %v113 = vunpack.c.l.b16 %v74
    %v114 = vunpack.c.l.b16 %v75
    %v115 = vunpack.c.l.b16 %v76
    %v116 = vunpack.c.l.b16 %v77
    %v117 = vunpack.c.l.b16 %v78
    %v118 = vpack.c.b16 %v103, %v102
    %v119 = vpack.c.b16 %v105, %v104
    %v120 = vpack.c.b16 %v107, %v106
    %v121 = vpack.c.b16 %v109, %v108
    %v122 = vpack.c.b16 %v111, %v110
    %v123 = vpack.c.b16 %v113, %v112
    %v124 = vpack.c.b16 %v115, %v114
    %v125 = vpack.c.b16 %v117, %v116
    %134 = vmatprep.subr.bf16.mxu0 0
    %135 = vmatpush1.bf16.msra.mxu0 %v125
    %136 = vmatprep.subr.bf16.mxu0 0
    %137 = vmatpush1.bf16.msra.mxu0 %v124
    %138 = vmatprep.subr.bf16.mxu0 0
    %139 = vmatpush1.bf16.msra.mxu0 %v123
    %140 = vmatprep.subr.bf16.mxu0 0
    %141 = vmatpush1.bf16.msra.mxu0 %v122
    %142 = vmatprep.subr.bf16.mxu0 0
    %143 = vmatpush1.bf16.msra.mxu0 %v121
    %144 = vmatprep.subr.bf16.mxu0 0
    %145 = vmatpush1.bf16.msra.mxu0 %v120
    %146 = vmatprep.subr.bf16.mxu0 0
    %147 = vmatpush1.bf16.msra.mxu0 %v119
    %148 = vmatprep.subr.bf16.mxu0 0
    %149 = vmatpush1.bf16.msra.mxu0 %v118
    %150 = vmatprep.subr.bf16.mxu0 0
    %151 = vmatpush2.bf16.msra.mxu0 0
    %152 = vmatprep.subr.bf16.mxu0 0
    %153 = vmatpush2.bf16.msra.mxu0 0
    %154 = vmatprep.subr.bf16.mxu0 0
    %155 = vmatpush2.bf16.msra.mxu0 0
    %156 = vmatprep.subr.bf16.mxu0 0
    %157 = vmatpush2.bf16.msra.mxu0 0
    %158 = vmatprep.subr.bf16.mxu0 0
    %159 = vmatpush2.bf16.msra.mxu0 0
    %160 = vmatprep.subr.bf16.mxu0 0
    %161 = vmatpush2.bf16.msra.mxu0 0
    %162 = vmatprep.subr.bf16.mxu0 0
    %163 = vmatpush2.bf16.msra.mxu0 0
    %164 = vmatprep.subr.bf16.mxu0 0
    %165 = vmatpush2.bf16.msra.mxu0 0
    %166 = vmatprep.mubr.bf16.mxu0 0
    %167 = vmatmul.mubr.bf16.gmra.mxu0 %v62
    %v168 = vpop.f32.mrf.mxu0
    %v169 = vadd.f32 %v84, %v168
    %v170 = vpop.f32.mrf.mxu0
    %v171 = vpop.f32.mrf.mxu0
    %v172 = vpop.f32.mrf.mxu0
    %173 = vdwg.mxu0
    %v174 = vtanh.pop %v169
    %v175 = vpack.c.bf16 %v174, %v174
    %v176 = vld [vmem:[#allocation7] sm:$0xf]
    %v177 = vld [vmem:[#allocation7 + $0x4] sm:$0xf]
    %v178 = vld [vmem:[#allocation7 + $0x8] sm:$0xf]
    %v179 = vld [vmem:[#allocation7 + $0xc] sm:$0xf]
    %v180 = vld [vmem:[#allocation7 + $0x10] sm:$0xf]
    %v181 = vld [vmem:[#allocation7 + $0x14] sm:$0xf]
    %v182 = vld [vmem:[#allocation7 + $0x18] sm:$0xf]
    %v183 = vld [vmem:[#allocation7 + $0x1c] sm:$0xf]
    %v184 = vld [vmem:[#allocation7 + $0x20] sm:$0xf]
    %v185 = vld [vmem:[#allocation7 + $0x24] sm:$0xf]
    %v186 = vld [vmem:[#allocation7 + $0x28] sm:$0xf]
    %v187 = vld [vmem:[#allocation7 + $0x2c] sm:$0xf]
    %v188 = vld [vmem:[#allocation7 + $0x30] sm:$0xf]
    %v189 = vld [vmem:[#allocation7 + $0x34] sm:$0xf]
    %v190 = vld [vmem:[#allocation7 + $0x38] sm:$0xf]
    %v191 = vld [vmem:[#allocation7 + $0x3c] sm:$0xf]
    %v192 = vld [vmem:[%s4] sm:$0x1]
    %v194 = vlaneseq
    %v195 = vshrl.u32 %v194, 7
    %v196 = vsub.s32 0, %v195
    %v197 = vrot.slane %v192, %v196
    %v215 = vunpack.c.l.b16 %v176
    %v216 = vunpack.c.l.b16 %v177
    %v217 = vunpack.c.l.b16 %v178
    %v218 = vunpack.c.l.b16 %v179
    %v219 = vunpack.c.l.b16 %v180
    %v220 = vunpack.c.l.b16 %v181
    %v221 = vunpack.c.l.b16 %v182
    %v222 = vunpack.c.l.b16 %v183
    %v223 = vunpack.c.l.b16 %v184
    %v224 = vunpack.c.l.b16 %v185
    %v225 = vunpack.c.l.b16 %v186
    %v226 = vunpack.c.l.b16 %v187
    %v227 = vunpack.c.l.b16 %v188
    %v228 = vunpack.c.l.b16 %v189
    %v229 = vunpack.c.l.b16 %v190
    %v230 = vunpack.c.l.b16 %v191
    %v231 = vpack.c.b16 %v216, %v215
    %v232 = vpack.c.b16 %v218, %v217
    %v233 = vpack.c.b16 %v220, %v219
    %v234 = vpack.c.b16 %v222, %v221
    %v235 = vpack.c.b16 %v224, %v223
    %v236 = vpack.c.b16 %v226, %v225
    %v237 = vpack.c.b16 %v228, %v227
    %v238 = vpack.c.b16 %v230, %v229
    %247 = vmatprep.subr.bf16.mxu0 0
    %248 = vmatpush1.bf16.msra.mxu0 %v238
    %249 = vmatprep.subr.bf16.mxu0 0
    %250 = vmatpush1.bf16.msra.mxu0 %v237
    %251 = vmatprep.subr.bf16.mxu0 0
    %252 = vmatpush1.bf16.msra.mxu0 %v236
    %253 = vmatprep.subr.bf16.mxu0 0
    %254 = vmatpush1.bf16.msra.mxu0 %v235
    %255 = vmatprep.subr.bf16.mxu0 0
    %256 = vmatpush1.bf16.msra.mxu0 %v234
    %257 = vmatprep.subr.bf16.mxu0 0
    %258 = vmatpush1.bf16.msra.mxu0 %v233
    %259 = vmatprep.subr.bf16.mxu0 0
    %260 = vmatpush1.bf16.msra.mxu0 %v232
    %261 = vmatprep.subr.bf16.mxu0 0
    %262 = vmatpush1.bf16.msra.mxu0 %v231
    %263 = vmatprep.subr.bf16.mxu0 0
    %264 = vmatpush2.bf16.msra.mxu0 0
    %265 = vmatprep.subr.bf16.mxu0 0
    %266 = vmatpush2.bf16.msra.mxu0 0
    %267 = vmatprep.subr.bf16.mxu0 0
    %268 = vmatpush2.bf16.msra.mxu0 0
    %269 = vmatprep.subr.bf16.mxu0 0
    %270 = vmatpush2.bf16.msra.mxu0 0
    %271 = vmatprep.subr.bf16.mxu0 0
    %272 = vmatpush2.bf16.msra.mxu0 0
    %273 = vmatprep.subr.bf16.mxu0 0
    %274 = vmatpush2.bf16.msra.mxu0 0
    %275 = vmatprep.subr.bf16.mxu0 0
    %276 = vmatpush2.bf16.msra.mxu0 0
    %277 = vmatprep.subr.bf16.mxu0 0
    %278 = vmatpush2.bf16.msra.mxu0 0
    %279 = vmatprep.mubr.bf16.mxu0 0
    %280 = vmatmul.mubr.bf16.gmra.mxu0 %v175
    %v281 = vpop.f32.mrf.mxu0
    %v282 = vadd.f32 %v197, %v281
    %v283 = vpop.f32.mrf.mxu0
    %v284 = vpop.f32.mrf.mxu0
    %v285 = vpop.f32.mrf.mxu0
    %286 = vdwg.mxu0
    %287 = vst [vmem:[#allocation8] sm:$0xff] %v282
    // Predicated region
    $region34: #{tpu_custom_call.1} parent=1 // pred_check
      _
    $region35: #{tpu_custom_call.1} parent=1 // pred_check_branch
      %289 = sbr.rel (0) target = $region37
    $region36: #{tpu_custom_call.1} parent=1 // pred_region
      %s291 = ssub.s32 128, 128
      %292 = vsyncadd [#allocation4], %s291
      %s294 = sshll.u32 [#allocation8], 4
      %s295 = int_to_ptr.vmem [resolvable:$true] %s294
      %297 = dma.vmem_to_hbm [thread:$0]  %s295, 128, %s5, [#allocation4]
    $region37: #{tpu_custom_call.1} parent=1 // pred_fallthru
      _
    // Predicated region
    $region38: #{tpu_custom_call.1} parent=1 // pred_check
      _
    $region39: #{tpu_custom_call.1} parent=1 // pred_check_branch
      %299 = sbr.rel (0) target = $region41
    $region40: #{tpu_custom_call.1} parent=1 // pred_region
      %300 = dma.done [#allocation4], 128
    $region41: #{tpu_custom_call.1} parent=1 // pred_fallthru
      _
    %301 = vsyncpa [#allocation3], 1
    %302 = vsyncpa [#allocation6], 1
    %303 = vsyncpa [#allocation4], 1

// kernel: tpu_custom_call.1
$region0: #{tpu_custom_call.1}
  #allocation0 [shape = 'u32[]', space=smem, size = 0x4, offset = 0x4, fixed_abs, tag = 'smem constant byte address 0x4 - core index']
  #allocation1 [shape = 'u32[144,128]{1,0:T(1,128)}', space=vmem, size = 0x12000, scoped, tag = 'internal scratch']
  %s0 = inlined_call_operand.hbm [shape: f32[8,1024], index: 0, kind: input, shape index: {}]
  %s1 = inlined_call_operand.hbm [shape: bf16[128,128], index: 1, kind: input, shape index: {}]
  %s2 = inlined_call_operand.vmem [shape: f32[1,128], index: 2, kind: input, shape index: {}]
  %s3 = inlined_call_operand.hbm [shape: bf16[128,128], index: 3, kind: input, shape index: {}]
  %s4 = inlined_call_operand.vmem [shape: f32[1,128], index: 4, kind: input, shape index: {}]
  %s5 = inlined_call_operand.hbm [shape: f32[8,128], index: 5, kind: output, shape index: {}]
  %s6 = sld [smem:[#allocation0]]
  $region42: #{tpu_custom_call.1} parent=0
    _
  %s8 = ssub.s32 1, %s6
  %s9 = scalar_select 0, %s8, %s6
  $region1: #{tpu_custom_call.1} parent=0
    #allocation2 [shape = 'u8[4096]{0}', space=vmem, size = 0x1000, scoped, tag = 'input window, operand 0, single buffered']
    #allocation3 [shape = 's32[1]{0}', space=sflag, size = 0x4, scoped, tag = 'scoped memory for tpu_custom_call.1']
    #allocation4 [shape = 's32[1]{0}', space=sflag, size = 0x4, scoped, tag = 'scoped memory for tpu_custom_call.1']
    #allocation5 [shape = 'u8[32768]{0}', space=vmem, size = 0x8000, scoped, tag = 'input window, operand 1, single buffered']
    #allocation6 [shape = 's32[1]{0}', space=sflag, size = 0x4, scoped, tag = 'scoped memory for tpu_custom_call.1']
    #allocation7 [shape = 'u8[32768]{0}', space=vmem, size = 0x8000, scoped, tag = 'input window, operand 3, single buffered']
    #allocation8 [shape = 'u8[4096]{0}', space=vmem, size = 0x1000, scoped, tag = 'output window, operand 0, single buffered']
    %10 = vsyncpa [#allocation3], 0
    %11 = vsyncpa [#allocation6], 0
    %12 = vsyncpa [#allocation4], 0
    // Predicated region
    $region2: #{tpu_custom_call.1} parent=1 // pred_check
      _
    $region3: #{tpu_custom_call.1} parent=1 // pred_check_branch
      %14 = sbr.rel (0) target = $region5
    $region4: #{tpu_custom_call.1} parent=1 // pred_region
      %s16 = ssub.s32 128, 128
      %17 = vsyncadd [#allocation3], %s16
      %s19 = sshll.u32 [#allocation2], 4
      %s20 = int_to_ptr.vmem [resolvable:$true] %s19
      %22 = dma.hbm_to_vmem [thread:$0]  %s0, 128, %s20, [#allocation3]
    $region5: #{tpu_custom_call.1} parent=1 // pred_fallthru
      _
    // Predicated region
    $region6: #{tpu_custom_call.1} parent=1 // pred_check
      _
    $region7: #{tpu_custom_call.1} parent=1 // pred_check_branch
      %24 = sbr.rel (0) target = $region9
    $region8: #{tpu_custom_call.1} parent=1 // pred_region
      %s26 = ssub.s32 1024, 1024
      %27 = vsyncadd [#allocation6], %s26
      %s28 = sshll.u32 [#allocation5], 4
      %s29 = int_to_ptr.vmem [resolvable:$true] %s28
      %34 = dma.hbm_to_vmem [thread:$0]  %s1, 1024, %s29, [#allocation6], 64, 64, 4
    $region9: #{tpu_custom_call.1} parent=1 // pred_fallthru
      _
    // Predicated region
    $region10: #{tpu_custom_call.1} parent=1 // pred_check
      _
    $region11: #{tpu_custom_call.1} parent=1 // pred_check_branch
      %36 = sbr.rel (0) target = $region13
    $region12: #{tpu_custom_call.1} parent=1 // pred_region
      _
    $region13: #{tpu_custom_call.1} parent=1 // pred_fallthru
      _
    // Predicated region
    $region14: #{tpu_custom_call.1} parent=1 // pred_check
      _
    $region15: #{tpu_custom_call.1} parent=1 // pred_check_branch
      %38 = sbr.rel (0) target = $region17
    $region16: #{tpu_custom_call.1} parent=1 // pred_region
      %s40 = ssub.s32 1024, 1024
      %41 = vsyncadd [#allocation6], %s40
      %s42 = sshll.u32 [#allocation7], 4
      %s43 = int_to_ptr.vmem [resolvable:$true] %s42
      %48 = dma.hbm_to_vmem [thread:$0]  %s3, 1024, %s43, [#allocation6], 64, 64, 4
    $region17: #{tpu_custom_call.1} parent=1 // pred_fallthru
      _
    // Predicated region
    $region18: #{tpu_custom_call.1} parent=1 // pred_check
      _
    $region19: #{tpu_custom_call.1} parent=1 // pred_check_branch
      %50 = sbr.rel (0) target = $region21
    $region20: #{tpu_custom_call.1} parent=1 // pred_region
      _
    $region21: #{tpu_custom_call.1} parent=1 // pred_fallthru
      _
    // Predicated region
    $region22: #{tpu_custom_call.1} parent=1 // pred_check
      _
    $region23: #{tpu_custom_call.1} parent=1 // pred_check_branch
      %52 = sbr.rel (0) target = $region25
    $region24: #{tpu_custom_call.1} parent=1 // pred_region
      %53 = dma.done [#allocation3], 128
    $region25: #{tpu_custom_call.1} parent=1 // pred_fallthru
      _
    // Predicated region
    $region26: #{tpu_custom_call.1} parent=1 // pred_check
      _
    $region27: #{tpu_custom_call.1} parent=1 // pred_check_branch
      %55 = sbr.rel (0) target = $region29
    $region28: #{tpu_custom_call.1} parent=1 // pred_region
      %56 = dma.done [#allocation6], 1024
    $region29: #{tpu_custom_call.1} parent=1 // pred_fallthru
      _
    // Predicated region
    $region30: #{tpu_custom_call.1} parent=1 // pred_check
      _
    $region31: #{tpu_custom_call.1} parent=1 // pred_check_branch
      %58 = sbr.rel (0) target = $region33
    $region32: #{tpu_custom_call.1} parent=1 // pred_region
      %59 = dma.done [#allocation6], 1024
    $region33: #{tpu_custom_call.1} parent=1 // pred_fallthru
      _
    %v61 = vld [vmem:[#allocation2] sm:$0xff]
    %v62 = vpack.c.bf16 %v61, %v61
    %v63 = vld [vmem:[#allocation5] sm:$0xf]
    %v64 = vld [vmem:[#allocation5 + $0x4] sm:$0xf]
    %v65 = vld [vmem:[#allocation5 + $0x8] sm:$0xf]
    %v66 = vld [vmem:[#allocation5 + $0xc] sm:$0xf]
    %v67 = vld [vmem:[#allocation5 + $0x10] sm:$0xf]
    %v68 = vld [vmem:[#allocation5 + $0x14] sm:$0xf]
    %v69 = vld [vmem:[#allocation5 + $0x18] sm:$0xf]
    %v70 = vld [vmem:[#allocation5 + $0x1c] sm:$0xf]
    %v71 = vld [vmem:[#allocation5 + $0x20] sm:$0xf]
    %v72 = vld [vmem:[#allocation5 + $0x24] sm:$0xf]
    %v73 = vld [vmem:[#allocation5 + $0x28] sm:$0xf]
    %v74 = vld [vmem:[#allocation5 + $0x2c] sm:$0xf]
    %v75 = vld [vmem:[#allocation5 + $0x30] sm:$0xf]
    %v76 = vld [vmem:[#allocation5 + $0x34] sm:$0xf]
    %v77 = vld [vmem:[#allocation5 + $0x38] sm:$0xf]
    %v78 = vld [vmem:[#allocation5 + $0x3c] sm:$0xf]
    %v79 = vld [vmem:[%s2] sm:$0x1]
    %v81 = vlaneseq
    %v82 = vshrl.u32 %v81, 7
    %v83 = vsub.s32 0, %v82
    %v84 = vrot.slane %v79, %v83
    %v102 = vunpack.c.l.b16 %v63
    %v103 = vunpack.c.l.b16 %v64
    %v104 = vunpack.c.l.b16 %v65
    %v105 = vunpack.c.l.b16 %v66
    %v106 = vunpack.c.l.b16 %v67
    %v107 = vunpack.c.l.b16 %v68
    %v108 = vunpack.c.l.b16 %v69
    %v109 = vunpack.c.l.b16 %v70
    %v110 = vunpack.c.l.b16 %v71
    %v111 = vunpack.c.l.b16 %v72
    %v112 = vunpack.c.l.b16 %v73
    %v113 = vunpack.c.l.b16 %v74
    %v114 = vunpack.c.l.b16 %v75
    %v115 = vunpack.c.l.b16 %v76
    %v116 = vunpack.c.l.b16 %v77
    %v117 = vunpack.c.l.b16 %v78
    %v118 = vpack.c.b16 %v103, %v102
    %v119 = vpack.c.b16 %v105, %v104
    %v120 = vpack.c.b16 %v107, %v106
    %v121 = vpack.c.b16 %v109, %v108
    %v122 = vpack.c.b16 %v111, %v110
    %v123 = vpack.c.b16 %v113, %v112
    %v124 = vpack.c.b16 %v115, %v114
    %v125 = vpack.c.b16 %v117, %v116
    %134 = vmatprep.subr.bf16.mxu0 0
    %135 = vmatpush1.bf16.msra.mxu0 %v125
    %136 = vmatprep.subr.bf16.mxu0 0
    %137 = vmatpush1.bf16.msra.mxu0 %v124
    %138 = vmatprep.subr.bf16.mxu0 0
    %139 = vmatpush1.bf16.msra.mxu0 %v123
    %140 = vmatprep.subr.bf16.mxu0 0
    %141 = vmatpush1.bf16.msra.mxu0 %v122
    %142 = vmatprep.subr.bf16.mxu0 0
    %143 = vmatpush1.bf16.msra.mxu0 %v121
    %144 = vmatprep.subr.bf16.mxu0 0
    %145 = vmatpush1.bf16.msra.mxu0 %v120
    %146 = vmatprep.subr.bf16.mxu0 0
    %147 = vmatpush1.bf16.msra.mxu0 %v119
    %148 = vmatprep.subr.bf16.mxu0 0
    %149 = vmatpush1.bf16.msra.mxu0 %v118
    %150 = vmatprep.subr.bf16.mxu0 0
    %151 = vmatpush2.bf16.msra.mxu0 0
    %152 = vmatprep.subr.bf16.mxu0 0
    %153 = vmatpush2.bf16.msra.mxu0 0
    %154 = vmatprep.subr.bf16.mxu0 0
    %155 = vmatpush2.bf16.msra.mxu0 0
    %156 = vmatprep.subr.bf16.mxu0 0
    %157 = vmatpush2.bf16.msra.mxu0 0
    %158 = vmatprep.subr.bf16.mxu0 0
    %159 = vmatpush2.bf16.msra.mxu0 0
    %160 = vmatprep.subr.bf16.mxu0 0
    %161 = vmatpush2.bf16.msra.mxu0 0
    %162 = vmatprep.subr.bf16.mxu0 0
    %163 = vmatpush2.bf16.msra.mxu0 0
    %164 = vmatprep.subr.bf16.mxu0 0
    %165 = vmatpush2.bf16.msra.mxu0 0
    %166 = vmatprep.mubr.bf16.mxu0 0
    %167 = vmatmul.mubr.bf16.gmra.mxu0 %v62
    %v168 = vpop.f32.mrf.mxu0
    %v169 = vadd.f32 %v84, %v168
    %v170 = vpop.f32.mrf.mxu0
    %v171 = vpop.f32.mrf.mxu0
    %v172 = vpop.f32.mrf.mxu0
    %173 = vdwg.mxu0
    %v174 = vtanh.pop %v169
    %v175 = vpack.c.bf16 %v174, %v174
    %v176 = vld [vmem:[#allocation7] sm:$0xf]
    %v177 = vld [vmem:[#allocation7 + $0x4] sm:$0xf]
    %v178 = vld [vmem:[#allocation7 + $0x8] sm:$0xf]
    %v179 = vld [vmem:[#allocation7 + $0xc] sm:$0xf]
    %v180 = vld [vmem:[#allocation7 + $0x10] sm:$0xf]
    %v181 = vld [vmem:[#allocation7 + $0x14] sm:$0xf]
    %v182 = vld [vmem:[#allocation7 + $0x18] sm:$0xf]
    %v183 = vld [vmem:[#allocation7 + $0x1c] sm:$0xf]
    %v184 = vld [vmem:[#allocation7 + $0x20] sm:$0xf]
    %v185 = vld [vmem:[#allocation7 + $0x24] sm:$0xf]
    %v186 = vld [vmem:[#allocation7 + $0x28] sm:$0xf]
    %v187 = vld [vmem:[#allocation7 + $0x2c] sm:$0xf]
    %v188 = vld [vmem:[#allocation7 + $0x30] sm:$0xf]
    %v189 = vld [vmem:[#allocation7 + $0x34] sm:$0xf]
    %v190 = vld [vmem:[#allocation7 + $0x38] sm:$0xf]
    %v191 = vld [vmem:[#allocation7 + $0x3c] sm:$0xf]
    %v192 = vld [vmem:[%s4] sm:$0x1]
    %v194 = vlaneseq
    %v195 = vshrl.u32 %v194, 7
    %v196 = vsub.s32 0, %v195
    %v197 = vrot.slane %v192, %v196
    %v215 = vunpack.c.l.b16 %v176
    %v216 = vunpack.c.l.b16 %v177
    %v217 = vunpack.c.l.b16 %v178
    %v218 = vunpack.c.l.b16 %v179
    %v219 = vunpack.c.l.b16 %v180
    %v220 = vunpack.c.l.b16 %v181
    %v221 = vunpack.c.l.b16 %v182
    %v222 = vunpack.c.l.b16 %v183
    %v223 = vunpack.c.l.b16 %v184
    %v224 = vunpack.c.l.b16 %v185
    %v225 = vunpack.c.l.b16 %v186
    %v226 = vunpack.c.l.b16 %v187
    %v227 = vunpack.c.l.b16 %v188
    %v228 = vunpack.c.l.b16 %v189
    %v229 = vunpack.c.l.b16 %v190
    %v230 = vunpack.c.l.b16 %v191
    %v231 = vpack.c.b16 %v216, %v215
    %v232 = vpack.c.b16 %v218, %v217
    %v233 = vpack.c.b16 %v220, %v219
    %v234 = vpack.c.b16 %v222, %v221
    %v235 = vpack.c.b16 %v224, %v223
    %v236 = vpack.c.b16 %v226, %v225
    %v237 = vpack.c.b16 %v228, %v227
    %v238 = vpack.c.b16 %v230, %v229
    %247 = vmatprep.subr.bf16.mxu0 0
    %248 = vmatpush1.bf16.msra.mxu0 %v238
    %249 = vmatprep.subr.bf16.mxu0 0
    %250 = vmatpush1.bf16.msra.mxu0 %v237
    %251 = vmatprep.subr.bf16.mxu0 0
    %252 = vmatpush1.bf16.msra.mxu0 %v236
    %253 = vmatprep.subr.bf16.mxu0 0
    %254 = vmatpush1.bf16.msra.mxu0 %v235
    %255 = vmatprep.subr.bf16.mxu0 0
    %256 = vmatpush1.bf16.msra.mxu0 %v234
    %257 = vmatprep.subr.bf16.mxu0 0
    %258 = vmatpush1.bf16.msra.mxu0 %v233
    %259 = vmatprep.subr.bf16.mxu0 0
    %260 = vmatpush1.bf16.msra.mxu0 %v232
    %261 = vmatprep.subr.bf16.mxu0 0
    %262 = vmatpush1.bf16.msra.mxu0 %v231
    %263 = vmatprep.subr.bf16.mxu0 0
    %264 = vmatpush2.bf16.msra.mxu0 0
    %265 = vmatprep.subr.bf16.mxu0 0
    %266 = vmatpush2.bf16.msra.mxu0 0
    %267 = vmatprep.subr.bf16.mxu0 0
    %268 = vmatpush2.bf16.msra.mxu0 0
    %269 = vmatprep.subr.bf16.mxu0 0
    %270 = vmatpush2.bf16.msra.mxu0 0
    %271 = vmatprep.subr.bf16.mxu0 0
    %272 = vmatpush2.bf16.msra.mxu0 0
    %273 = vmatprep.subr.bf16.mxu0 0
    %274 = vmatpush2.bf16.msra.mxu0 0
    %275 = vmatprep.subr.bf16.mxu0 0
    %276 = vmatpush2.bf16.msra.mxu0 0
    %277 = vmatprep.subr.bf16.mxu0 0
    %278 = vmatpush2.bf16.msra.mxu0 0
    %279 = vmatprep.mubr.bf16.mxu0 0
    %280 = vmatmul.mubr.bf16.gmra.mxu0 %v175
    %v281 = vpop.f32.mrf.mxu0
    %v282 = vadd.f32 %v197, %v281
    %v283 = vpop.f32.mrf.mxu0
    %v284 = vpop.f32.mrf.mxu0
    %v285 = vpop.f32.mrf.mxu0
    %286 = vdwg.mxu0
    %287 = vst [vmem:[#allocation8] sm:$0xff] %v282
    // Predicated region
    $region34: #{tpu_custom_call.1} parent=1 // pred_check
      _
    $region35: #{tpu_custom_call.1} parent=1 // pred_check_branch
      %289 = sbr.rel (0) target = $region37
    $region36: #{tpu_custom_call.1} parent=1 // pred_region
      %s291 = ssub.s32 128, 128
      %292 = vsyncadd [#allocation4], %s291
      %s294 = sshll.u32 [#allocation8], 4
      %s295 = int_to_ptr.vmem [resolvable:$true] %s294
      %297 = dma.vmem_to_hbm [thread:$0]  %s295, 128, %s5, [#allocation4]
    $region37: #{tpu_custom_call.1} parent=1 // pred_fallthru
      _
    // Predicated region
    $region38: #{tpu_custom_call.1} parent=1 // pred_check
      _
    $region39: #{tpu_custom_call.1} parent=1 // pred_check_branch
      %299 = sbr.rel (0) target = $region41
    $region40: #{tpu_custom_call.1} parent=1 // pred_region
      %300 = dma.done [#allocation4], 128
    $region41: #{tpu_custom_call.1} parent=1 // pred_fallthru
      _
    %301 = vsyncpa [#allocation3], 1
    %302 = vsyncpa [#allocation6], 1
    %303 = vsyncpa [#allocation4], 1

</llo_original>
